<compile_context>
chip_gen: v5e
topology: v5e:2x2
jax: 0.10.0
libtpu: 0.0.40
codegen_flags: <defaults>
</compile_context>

<pallas_src>
import jax
import jax.numpy as jnp
from jax.experimental import pallas as pl
from jax.experimental.pallas import tpu as pltpu


# ----------------------------- in-kernel math -------------------------------

_SQRT_HALF = 0.7071067811865476


def _gelu(x):
    # exact (erf-based) gelu, matching BERT's ACT2FN["gelu"]
    return 0.5 * x * (1.0 + jax.lax.erf(x * _SQRT_HALF))


def _layer_norm(x, gamma, beta, eps=1e-12):
    # two-pass statistics (mean, then centered sum of squares), f32 — robust
    # to a large post-GELU mean (review correctness concern #1).
    mean = jnp.mean(x, axis=-1, keepdims=True)
    xc = x - mean
    var = jnp.mean(xc * xc, axis=-1, keepdims=True)
    return xc * jax.lax.rsqrt(var + eps) * gamma + beta


# ------------------------- kernel 1 : fused MLP ------------------------------

def _mlp_kernel(x_ref, w1_ref, vec_ref, w2_ref, h_ref):
    # vec_ref rows: 0=b1 1=g1 2=be1 3=b2 4=g2 5=be2 (rows 6,7 are zero pad)
    x = x_ref[...]                                               # (tm, 3H)
    b1, g1, be1 = vec_ref[0:1, :], vec_ref[1:2, :], vec_ref[2:3, :]
    b2, g2, be2 = vec_ref[3:4, :], vec_ref[4:5, :], vec_ref[5:6, :]

    h = jnp.dot(x, w1_ref[...], preferred_element_type=jnp.float32) + b1
    h = _layer_norm(_gelu(h), g1, be1)
    h = jnp.dot(h.astype(w2_ref.dtype), w2_ref[...],
                preferred_element_type=jnp.float32) + b2
    h = _layer_norm(_gelu(h), g2, be2)
    h_ref[...] = h.astype(h_ref.dtype)                           # (tm, H)


# ------------------ kernel 2 : weight-stationary decoder ---------------------

def _decoder_kernel(h_ref, wd_ref, bd_ref, out_ref):
    out_ref[...] = (jnp.dot(h_ref[...], wd_ref[...],
                            preferred_element_type=jnp.float32)
                    + bd_ref[...]).astype(out_ref.dtype)


# -------------------------------- helpers ------------------------------------

def _round_up(x, m):
    return (x + m - 1) // m * m


def _vmem_limit(need_bytes):
    # generous headroom for compiler-internal scratch; stays well inside
    # v7x's 64 MiB physical VMEM at the default tile sizes used below.
    return int(min(max(2 * need_bytes + (8 << 20), 32 << 20), 120 << 20))


def _spec(shape, index_map, buffer_count=None):
    # BlockSpec with optional single/multi buffering; fall back gracefully if
    # this jax version's BlockSpec lacks the pipeline_mode kwarg.
    if buffer_count is not None:
        try:
            return pl.BlockSpec(shape, index_map,
                                pipeline_mode=pl.Buffered(buffer_count))
        except TypeError:
            pass
    return pl.BlockSpec(shape, index_map)


def prepare_params(params, *, compute_dtype=jnp.bfloat16, tn=None):
    """One-time pad / cast / pack of the head parameters.

    Hoists the (H, V) decoder pad + dtype cast out of the per-call path and
    packs the six (1, H) vectors (b1, g1, be1, b2, g2, be2) into one (8, H)
    slab so the MLP kernel sees a single small input instead of six.
    """
    (w1, b1, g1, be1, w2, b2, g2, be2, wd, bd) = params
    in_features, H = w1.shape
    V = wd.shape[1]

    if tn is None:
        tn = min(2048, _round_up(V, 128))          # lane-dense vocab tile
    tn = _round_up(tn, 128)
    V_pad = _round_up(V, tn)
    bd = jnp.reshape(bd, (1, V))
    if V_pad != V:
        wd = jnp.pad(wd, ((0, 0), (0, V_pad - V)))
        bd = jnp.pad(bd, ((0, 0), (0, V_pad - V)))

    vec = jnp.concatenate(
        [jnp.reshape(v, (1, H)).astype(jnp.float32)
         for v in (b1, g1, be1, b2, g2, be2)]
        + [jnp.zeros((2, H), jnp.float32)], axis=0)              # (8, H)

    return dict(
        w1=w1.astype(compute_dtype),
        w2=w2.astype(compute_dtype),
        wd=wd.astype(compute_dtype),
        vec=vec,
        bd=bd.astype(jnp.float32),
        in_features=in_features, H=H, V=V, V_pad=V_pad, tn=tn,
        compute_dtype=jnp.dtype(compute_dtype))


# -------------------------------- wrapper ------------------------------------

def pair_target_prediction_head(hidden_states, pairs, params=None, *,
                                prepared=None, tm=None, tn=None,
                                compute_dtype=jnp.bfloat16,
                                out_dtype=jnp.float32,
                                single_buffer_invariants=True):
    """hidden_states: (bs, S, H); pairs: (bs, P, 3) int32.
       Returns target_scores: (bs, P, V) in out_dtype (f32 by default)."""
    if prepared is None:
        prepared = prepare_params(params, compute_dtype=compute_dtype, tn=tn)

    bs, seq_len, dim = hidden_states.shape
    _, num_pairs, _ = pairs.shape
    H = prepared["H"]
    in_features = prepared["in_features"]
    V, V_pad, tn = prepared["V"], prepared["V_pad"], prepared["tn"]
    cdt = prepared["compute_dtype"]
    assert in_features == 3 * dim and H == dim

    # ------------------ gather + concat (stays in XLA) ------------------
    # TODO(synk): fuse the row gather into the MLP kernel via scalar-prefetched
    # pair indices (pl.Element row index maps) to skip the (M, 3H) round trip.
    left, here, right = pairs[:, :, 0], pairs[:, :, 1], pairs[:, :, 2]

    def gather(idx):
        idx_b = jnp.broadcast_to(idx[:, :, None], (bs, num_pairs, dim))
        return jnp.take_along_axis(hidden_states, idx_b, axis=1)

    # torch.cat((left_hidden, right_hidden, here_hidden), -1)
    x = jnp.concatenate((gather(left), gather(right), gather(here)), axis=-1)
    M = bs * num_pairs
    x = x.reshape(M, 3 * dim)

    # ------------------------------ tiling -------------------------------
    if tm is None:
        tm = 256 if M >= 256 else _round_up(M, 8)   # 256 matches v6e/v7x MXU
    tm = _round_up(min(tm, _round_up(M, 8)), 8)
    M_pad = _round_up(M, tm)
    if M_pad != M:
        # Zero-padded rows produce finite (meaningless) MLP / decoder rows;
        # they are sliced off below.  Keep them masked out if this output is
        # ever fed to softmax/argmax before slicing.
        x = jnp.pad(x, ((0, M_pad - M), (0, 0)))
    xc = x.astype(cdt)

    cb = jnp.dtype(cdt).itemsize
    ob = jnp.dtype(out_dtype).itemsize
    sb = 1 if single_buffer_invariants else 2
    inv_buf = 1 if single_buffer_invariants else None
    nM = M_pad // tm
    nV = V_pad // tn

    # ------------------------- kernel 1 : MLP ----------------------------
    mlp_vmem_need = (2 * tm * in_features * cb          # x (double-buffered)
                     + sb * in_features * H * cb        # w1
                     + sb * 8 * H * 4                   # packed vectors
                     + sb * H * H * cb                  # w2
                     + 2 * tm * H * cb)                 # h out
    mlp_cost = pl.CostEstimate(
        flops=2 * M_pad * (in_features * H + H * H),
        transcendentals=2 * M_pad * H,
        bytes_accessed=(M_pad * in_features * cb
                        + (in_features * H + H * H) * cb + 8 * H * 4
                        + M_pad * H * cb))

    h = pl.pallas_call(
        _mlp_kernel,
        out_shape=jax.ShapeDtypeStruct((M_pad, H), cdt),
        grid_spec=pltpu.PrefetchScalarGridSpec(
            num_scalar_prefetch=0,
            grid=(nM,),
            in_specs=[
                _spec((tm, in_features), lambda i: (i, 0)),
                _spec((in_features, H), lambda i: (0, 0), inv_buf),  # w1
                _spec((8, H), lambda i: (0, 0), inv_buf),            # packed vecs
                _spec((H, H), lambda i: (0, 0), inv_buf),            # w2
            ],
            out_specs=pl.BlockSpec((tm, H), lambda i: (i, 0)),
        ),
        compiler_params=pltpu.CompilerParams(
            dimension_semantics=("parallel",),
            vmem_limit_bytes=_vmem_limit(mlp_vmem_need)),
        cost_estimate=mlp_cost,
    )(xc, prepared["w1"], prepared["vec"], prepared["w2"])

    # --------------- kernel 2 : weight-stationary decoder ----------------
    dec_vmem_need = (2 * tm * H * cb + 2 * H * tn * cb
                     + 2 * tn * 4 + 2 * tm * tn * ob)
    dec_cost = pl.CostEstimate(
        flops=2 * M_pad * H * V_pad,
        transcendentals=0,
        bytes_accessed=(M_pad * H * cb * nV + H * V_pad * cb
                        + V_pad * 4 + M_pad * V_pad * ob))

    out = pl.pallas_call(
        _decoder_kernel,
        out_shape=jax.ShapeDtypeStruct((M_pad, V_pad), out_dtype),
        grid_spec=pltpu.PrefetchScalarGridSpec(
            num_scalar_prefetch=0,
            # vocab outer, M inner -> each wd tile is DMA'd exactly once while
            # every M tile sweeps under it (weight-stationary); both axes are
            # independent, so both are "parallel" (vocab sharding on v7x).
            grid=(nV, nM),
            in_specs=[
                pl.BlockSpec((tm, H), lambda j, i: (i, 0)),   # h tile
                pl.BlockSpec((H, tn), lambda j, i: (0, j)),   # decoder weight
                pl.BlockSpec((1, tn), lambda j, i: (0, j)),   # decoder bias
            ],
            out_specs=pl.BlockSpec((tm, tn), lambda j, i: (i, j)),
        ),
        compiler_params=pltpu.CompilerParams(
            dimension_semantics=("parallel", "parallel"),
            vmem_limit_bytes=_vmem_limit(dec_vmem_need)),
        cost_estimate=dec_cost,
    )(h, prepared["wd"], prepared["bd"])

    out = out[:M, :V]
    return out.reshape(bs, num_pairs, V)


# --------------------------- pure-JAX reference -------------------------------

def reference(hidden_states, pairs, params):
    bs, seq_len, dim = hidden_states.shape
    _, num_pairs, _ = pairs.shape
    left, here, right = pairs[:, :, 0], pairs[:, :, 1], pairs[:, :, 2]

    def gather(idx):
        idx_b = jnp.broadcast_to(idx[:, :, None], (bs, num_pairs, dim))
        return jnp.take_along_axis(hidden_states, idx_b, axis=1)

    def ln(x, gamma, beta, eps=1e-12):
        mean = jnp.mean(x, axis=-1, keepdims=True)
        var = jnp.mean((x - mean) ** 2, axis=-1, keepdims=True)
        return (x - mean) * jax.lax.rsqrt(var + eps) * gamma + beta

    x = jnp.concatenate((gather(left), gather(right), gather(here)), axis=-1)
    (w1, b1, g1, be1, w2, b2, g2, be2, wd, bd) = params
    h = ln(_gelu(x @ w1 + b1), g1, be1)
    h = ln(_gelu(h @ w2 + b2), g2, be2)
    return h @ wd + bd


# ----------------------------------- main -------------------------------------

if __name__ == "__main__":
    bs, seq_len, hidden_size, vocab_size, num_pairs = 2, 8, 32, 64, 8

    key = jax.random.PRNGKey(0)
    k = jax.random.split(key, 8)

    hidden_states = jax.random.normal(k[0], (bs, seq_len, hidden_size),
                                      dtype=jnp.float32)
    pairs = jax.random.randint(k[1], (bs, num_pairs, 3), 0, seq_len,
                               dtype=jnp.int32)

    # Deterministic synthetic parameters (shapes from the module __init__).
    w1 = 0.02 * jax.random.normal(k[2], (3 * hidden_size, hidden_size),
                                  jnp.float32)
    b1 = 0.01 * jax.random.normal(k[3], (1, hidden_size), jnp.float32)
    g1 = jnp.ones((1, hidden_size), jnp.float32)
    be1 = jnp.zeros((1, hidden_size), jnp.float32)
    w2 = 0.02 * jax.random.normal(k[4], (hidden_size, hidden_size),
                                  jnp.float32)
    b2 = 0.01 * jax.random.normal(k[5], (1, hidden_size), jnp.float32)
    g2 = jnp.ones((1, hidden_size), jnp.float32)
    be2 = jnp.zeros((1, hidden_size), jnp.float32)
    wd = 0.02 * jax.random.normal(k[6], (hidden_size, vocab_size),
                                  jnp.float32)
    bd = jnp.zeros((1, vocab_size), jnp.float32)   # module inits bias = zeros

    params = (w1, b1, g1, be1, w2, b2, g2, be2, wd, bd)

    ref = jax.block_until_ready(reference(hidden_states, pairs, params))

    def run(compute_dtype):
        prepared = prepare_params(params, compute_dtype=compute_dtype)
        try:
            return jax.block_until_ready(pair_target_prediction_head(
                hidden_states, pairs, prepared=prepared,
                compute_dtype=compute_dtype,
                single_buffer_invariants=True))
        except Exception:
            # Fall back if Buffered(1) single-buffering is rejected by this
            # jax/mosaic version; functionality is identical.
            return jax.block_until_ready(pair_target_prediction_head(
                hidden_states, pairs, prepared=prepared,
                compute_dtype=compute_dtype,
                single_buffer_invariants=False))

    # f32 path: tight check against the f32 reference.
    out_f32 = run(jnp.float32)
    assert out_f32.shape == (bs, num_pairs, vocab_size)
    assert jnp.allclose(out_f32, ref, atol=1e-4, rtol=1e-4), "f32 mismatch"

    # bf16 matmul path (MXU throughput, default for production): looser tol.
    out_bf16 = run(jnp.bfloat16)
    assert out_bf16.shape == (bs, num_pairs, vocab_size)
    assert jnp.allclose(out_bf16, ref, atol=5e-2, rtol=5e-2), "bf16 mismatch"

    print("KERNEL_OK")
</pallas_src>

<mosaic_0001>
module attributes {stable_mosaic.version = 11 : i64} {
  func.func @_mlp_kernel(%arg0: i32, %arg1: memref<16x96xf32, #tpu.memory_space<vmem>>, %arg2: memref<96x32xf32, #tpu.memory_space<vmem>>, %arg3: memref<8x32xf32, #tpu.memory_space<vmem>>, %arg4: memref<32x32xf32, #tpu.memory_space<vmem>>, %arg5: memref<16x32xf32, #tpu.memory_space<vmem>>) attributes {dimension_semantics = [#tpu.dimension_semantics<parallel>], iteration_bounds = array<i64: 1>, scalar_prefetch = 0 : i64, scratch_operands = 0 : i64, tpu.core_type = #tpu.core_type<tc>, window_params = [{transform_indices = @transform_0, window_bounds = array<i64: 16, 96>}, {pipeline_mode = #tpu.pipeline_mode<synchronous>, transform_indices = @transform_1, window_bounds = array<i64: 96, 32>}, {pipeline_mode = #tpu.pipeline_mode<synchronous>, transform_indices = @transform_2, window_bounds = array<i64: 8, 32>}, {pipeline_mode = #tpu.pipeline_mode<synchronous>, transform_indices = @transform_3, window_bounds = array<i64: 32, 32>}, {transform_indices = @transform_4, window_bounds = array<i64: 16, 32>}]} {
    %c0 = arith.constant 0 : index
    %c0_0 = arith.constant 0 : index
    %0 = vector.load %arg1[%c0, %c0_0] : memref<16x96xf32, #tpu.memory_space<vmem>>, vector<16x96xf32>
    %c0_1 = arith.constant 0 : index
    %c0_2 = arith.constant 0 : index
    %1 = vector.load %arg3[%c0_1, %c0_2] : memref<8x32xf32, #tpu.memory_space<vmem>>, vector<1x32xf32>
    %c1 = arith.constant 1 : index
    %c0_3 = arith.constant 0 : index
    %2 = vector.load %arg3[%c1, %c0_3] : memref<8x32xf32, #tpu.memory_space<vmem>>, vector<1x32xf32>
    %c2 = arith.constant 2 : index
    %c0_4 = arith.constant 0 : index
    %3 = vector.load %arg3[%c2, %c0_4] : memref<8x32xf32, #tpu.memory_space<vmem>>, vector<1x32xf32>
    %c3 = arith.constant 3 : index
    %c0_5 = arith.constant 0 : index
    %4 = vector.load %arg3[%c3, %c0_5] : memref<8x32xf32, #tpu.memory_space<vmem>>, vector<1x32xf32>
    %c4 = arith.constant 4 : index
    %c0_6 = arith.constant 0 : index
    %5 = vector.load %arg3[%c4, %c0_6] : memref<8x32xf32, #tpu.memory_space<vmem>>, vector<1x32xf32>
    %c5 = arith.constant 5 : index
    %c0_7 = arith.constant 0 : index
    %6 = vector.load %arg3[%c5, %c0_7] : memref<8x32xf32, #tpu.memory_space<vmem>>, vector<1x32xf32>
    %c0_8 = arith.constant 0 : index
    %c0_9 = arith.constant 0 : index
    %7 = vector.load %arg2[%c0_8, %c0_9] : memref<96x32xf32, #tpu.memory_space<vmem>>, vector<96x32xf32>
    %cst = arith.constant dense<0.000000e+00> : vector<16x32xf32>
    %8 = tpu.matmul %0, %7, %cst {dimension_numbers = #tpu.dot_dimension_numbers<[1], [0], [0], [1], [0, 0, 1, 1], [], []>} : vector<16x96xf32>, vector<96x32xf32>, vector<16x32xf32> -> vector<16x32xf32>
    %9 = vector.broadcast %1 : vector<1x32xf32> to vector<16x32xf32>
    %10 = arith.addf %8, %9 : vector<16x32xf32>
    %cst_10 = arith.constant 5.000000e-01 : f32
    %11 = vector.broadcast %cst_10 : f32 to vector<16x32xf32>
    %12 = arith.mulf %11, %10 : vector<16x32xf32>
    %cst_11 = arith.constant 0.707106769 : f32
    %13 = vector.broadcast %cst_11 : f32 to vector<16x32xf32>
    %14 = arith.mulf %10, %13 : vector<16x32xf32>
    %15 = math.erf %14 : vector<16x32xf32>
    %cst_12 = arith.constant 1.000000e+00 : f32
    %16 = vector.broadcast %cst_12 : f32 to vector<16x32xf32>
    %17 = arith.addf %16, %15 : vector<16x32xf32>
    %18 = arith.mulf %12, %17 : vector<16x32xf32>
    %cst_13 = arith.constant dense<0.000000e+00> : vector<16xf32>
    %19 = vector.multi_reduction <add>, %18, %cst_13 [1] : vector<16x32xf32> to vector<16xf32>
    %20 = vector.shape_cast %19 : vector<16xf32> to vector<16x1xf32>
    %cst_14 = arith.constant 3.200000e+01 : f32
    %21 = vector.broadcast %cst_14 : f32 to vector<16x1xf32>
    %22 = arith.divf %20, %21 : vector<16x1xf32>
    %23 = vector.broadcast %22 : vector<16x1xf32> to vector<16x32xf32>
    %24 = arith.subf %18, %23 : vector<16x32xf32>
    %25 = arith.mulf %24, %24 : vector<16x32xf32>
    %cst_15 = arith.constant dense<0.000000e+00> : vector<16xf32>
    %26 = vector.multi_reduction <add>, %25, %cst_15 [1] : vector<16x32xf32> to vector<16xf32>
    %27 = vector.shape_cast %26 : vector<16xf32> to vector<16x1xf32>
    %cst_16 = arith.constant 3.200000e+01 : f32
    %28 = vector.broadcast %cst_16 : f32 to vector<16x1xf32>
    %29 = arith.divf %27, %28 : vector<16x1xf32>
    %cst_17 = arith.constant 9.99999996E-13 : f32
    %30 = vector.broadcast %cst_17 : f32 to vector<16x1xf32>
    %31 = arith.addf %29, %30 : vector<16x1xf32>
    %32 = math.rsqrt %31 : vector<16x1xf32>
    %33 = vector.broadcast %32 : vector<16x1xf32> to vector<16x32xf32>
    %34 = arith.mulf %24, %33 : vector<16x32xf32>
    %35 = vector.broadcast %2 : vector<1x32xf32> to vector<16x32xf32>
    %36 = arith.mulf %34, %35 : vector<16x32xf32>
    %37 = vector.broadcast %3 : vector<1x32xf32> to vector<16x32xf32>
    %38 = arith.addf %36, %37 : vector<16x32xf32>
    %c0_18 = arith.constant 0 : index
    %c0_19 = arith.constant 0 : index
    %39 = vector.load %arg4[%c0_18, %c0_19] : memref<32x32xf32, #tpu.memory_space<vmem>>, vector<32x32xf32>
    %cst_20 = arith.constant dense<0.000000e+00> : vector<16x32xf32>
    %40 = tpu.matmul %38, %39, %cst_20 {dimension_numbers = #tpu.dot_dimension_numbers<[1], [0], [0], [1], [0, 0, 1, 1], [], []>} : vector<16x32xf32>, vector<32x32xf32>, vector<16x32xf32> -> vector<16x32xf32>
    %41 = vector.broadcast %4 : vector<1x32xf32> to vector<16x32xf32>
    %42 = arith.addf %40, %41 : vector<16x32xf32>
    %cst_21 = arith.constant 5.000000e-01 : f32
    %43 = vector.broadcast %cst_21 : f32 to vector<16x32xf32>
    %44 = arith.mulf %43, %42 : vector<16x32xf32>
    %cst_22 = arith.constant 0.707106769 : f32
    %45 = vector.broadcast %cst_22 : f32 to vector<16x32xf32>
    %46 = arith.mulf %42, %45 : vector<16x32xf32>
    %47 = math.erf %46 : vector<16x32xf32>
    %cst_23 = arith.constant 1.000000e+00 : f32
    %48 = vector.broadcast %cst_23 : f32 to vector<16x32xf32>
    %49 = arith.addf %48, %47 : vector<16x32xf32>
    %50 = arith.mulf %44, %49 : vector<16x32xf32>
    %cst_24 = arith.constant dense<0.000000e+00> : vector<16xf32>
    %51 = vector.multi_reduction <add>, %50, %cst_24 [1] : vector<16x32xf32> to vector<16xf32>
    %52 = vector.shape_cast %51 : vector<16xf32> to vector<16x1xf32>
    %cst_25 = arith.constant 3.200000e+01 : f32
    %53 = vector.broadcast %cst_25 : f32 to vector<16x1xf32>
    %54 = arith.divf %52, %53 : vector<16x1xf32>
    %55 = vector.broadcast %54 : vector<16x1xf32> to vector<16x32xf32>
    %56 = arith.subf %50, %55 : vector<16x32xf32>
    %57 = arith.mulf %56, %56 : vector<16x32xf32>
    %cst_26 = arith.constant dense<0.000000e+00> : vector<16xf32>
    %58 = vector.multi_reduction <add>, %57, %cst_26 [1] : vector<16x32xf32> to vector<16xf32>
    %59 = vector.shape_cast %58 : vector<16xf32> to vector<16x1xf32>
    %cst_27 = arith.constant 3.200000e+01 : f32
    %60 = vector.broadcast %cst_27 : f32 to vector<16x1xf32>
    %61 = arith.divf %59, %60 : vector<16x1xf32>
    %cst_28 = arith.constant 9.99999996E-13 : f32
    %62 = vector.broadcast %cst_28 : f32 to vector<16x1xf32>
    %63 = arith.addf %61, %62 : vector<16x1xf32>
    %64 = math.rsqrt %63 : vector<16x1xf32>
    %65 = vector.broadcast %64 : vector<16x1xf32> to vector<16x32xf32>
    %66 = arith.mulf %56, %65 : vector<16x32xf32>
    %67 = vector.broadcast %5 : vector<1x32xf32> to vector<16x32xf32>
    %68 = arith.mulf %66, %67 : vector<16x32xf32>
    %69 = vector.broadcast %6 : vector<1x32xf32> to vector<16x32xf32>
    %70 = arith.addf %68, %69 : vector<16x32xf32>
    %c0_29 = arith.constant 0 : index
    %c0_30 = arith.constant 0 : index
    %71 = vector.load %arg5[%c0_29, %c0_30] : memref<16x32xf32, #tpu.memory_space<vmem>>, vector<16x32xf32>
    tpu.vector_store %arg5[%c0_29, %c0_30], %70 {strides = array<i32>} : memref<16x32xf32, #tpu.memory_space<vmem>>, vector<16x32xf32>,
    return
  }
  func.func @transform_0(%arg0: i32) -> (i32, i32) {
    %c0_i32 = arith.constant 0 : i32
    %c0_i32_0 = arith.constant 0 : i32
    return %arg0, %c0_i32 : i32, i32
  }
  func.func @transform_1(%arg0: i32) -> (i32, i32) {
    %c0_i32 = arith.constant 0 : i32
    %c0_i32_0 = arith.constant 0 : i32
    %c0_i32_1 = arith.constant 0 : i32
    return %c0_i32, %c0_i32_0 : i32, i32
  }
  func.func @transform_2(%arg0: i32) -> (i32, i32) {
    %c0_i32 = arith.constant 0 : i32
    %c0_i32_0 = arith.constant 0 : i32
    %c0_i32_1 = arith.constant 0 : i32
    return %c0_i32, %c0_i32_0 : i32, i32
  }
  func.func @transform_3(%arg0: i32) -> (i32, i32) {
    %c0_i32 = arith.constant 0 : i32
    %c0_i32_0 = arith.constant 0 : i32
    %c0_i32_1 = arith.constant 0 : i32
    return %c0_i32, %c0_i32_0 : i32, i32
  }
  func.func @transform_4(%arg0: i32) -> (i32, i32) {
    %c0_i32 = arith.constant 0 : i32
    %c0_i32_0 = arith.constant 0 : i32
    return %arg0, %c0_i32 : i32, i32
  }
}

module attributes {stable_mosaic.version = 11 : i64} {
  func.func @_mlp_kernel(%arg0: i32, %arg1: memref<16x96xf32, #tpu.memory_space<vmem>>, %arg2: memref<96x32xf32, #tpu.memory_space<vmem>>, %arg3: memref<8x32xf32, #tpu.memory_space<vmem>>, %arg4: memref<32x32xf32, #tpu.memory_space<vmem>>, %arg5: memref<16x32xf32, #tpu.memory_space<vmem>>) attributes {dimension_semantics = [#tpu.dimension_semantics<parallel>], iteration_bounds = array<i64: 1>, scalar_prefetch = 0 : i64, scratch_operands = 0 : i64, tpu.core_type = #tpu.core_type<tc>, window_params = [{transform_indices = @transform_0, window_bounds = array<i64: 16, 96>}, {pipeline_mode = #tpu.pipeline_mode<synchronous>, transform_indices = @transform_1, window_bounds = array<i64: 96, 32>}, {pipeline_mode = #tpu.pipeline_mode<synchronous>, transform_indices = @transform_2, window_bounds = array<i64: 8, 32>}, {pipeline_mode = #tpu.pipeline_mode<synchronous>, transform_indices = @transform_3, window_bounds = array<i64: 32, 32>}, {transform_indices = @transform_4, window_bounds = array<i64: 16, 32>}]} {
    %c0 = arith.constant 0 : index
    %c0_0 = arith.constant 0 : index
    %0 = vector.load %arg1[%c0, %c0_0] : memref<16x96xf32, #tpu.memory_space<vmem>>, vector<16x96xf32>
    %c0_1 = arith.constant 0 : index
    %c0_2 = arith.constant 0 : index
    %1 = vector.load %arg3[%c0_1, %c0_2] : memref<8x32xf32, #tpu.memory_space<vmem>>, vector<1x32xf32>
    %c1 = arith.constant 1 : index
    %c0_3 = arith.constant 0 : index
    %2 = vector.load %arg3[%c1, %c0_3] : memref<8x32xf32, #tpu.memory_space<vmem>>, vector<1x32xf32>
    %c2 = arith.constant 2 : index
    %c0_4 = arith.constant 0 : index
    %3 = vector.load %arg3[%c2, %c0_4] : memref<8x32xf32, #tpu.memory_space<vmem>>, vector<1x32xf32>
    %c3 = arith.constant 3 : index
    %c0_5 = arith.constant 0 : index
    %4 = vector.load %arg3[%c3, %c0_5] : memref<8x32xf32, #tpu.memory_space<vmem>>, vector<1x32xf32>
    %c4 = arith.constant 4 : index
    %c0_6 = arith.constant 0 : index
    %5 = vector.load %arg3[%c4, %c0_6] : memref<8x32xf32, #tpu.memory_space<vmem>>, vector<1x32xf32>
    %c5 = arith.constant 5 : index
    %c0_7 = arith.constant 0 : index
    %6 = vector.load %arg3[%c5, %c0_7] : memref<8x32xf32, #tpu.memory_space<vmem>>, vector<1x32xf32>
    %c0_8 = arith.constant 0 : index
    %c0_9 = arith.constant 0 : index
    %7 = vector.load %arg2[%c0_8, %c0_9] : memref<96x32xf32, #tpu.memory_space<vmem>>, vector<96x32xf32>
    %cst = arith.constant dense<0.000000e+00> : vector<16x32xf32>
    %8 = tpu.matmul %0, %7, %cst {dimension_numbers = #tpu.dot_dimension_numbers<[1], [0], [0], [1], [0, 0, 1, 1], [], []>} : vector<16x96xf32>, vector<96x32xf32>, vector<16x32xf32> -> vector<16x32xf32>
    %9 = vector.broadcast %1 : vector<1x32xf32> to vector<16x32xf32>
    %10 = arith.addf %8, %9 : vector<16x32xf32>
    %cst_10 = arith.constant 5.000000e-01 : f32
    %11 = vector.broadcast %cst_10 : f32 to vector<16x32xf32>
    %12 = arith.mulf %11, %10 : vector<16x32xf32>
    %cst_11 = arith.constant 0.707106769 : f32
    %13 = vector.broadcast %cst_11 : f32 to vector<16x32xf32>
    %14 = arith.mulf %10, %13 : vector<16x32xf32>
    %15 = math.erf %14 : vector<16x32xf32>
    %cst_12 = arith.constant 1.000000e+00 : f32
    %16 = vector.broadcast %cst_12 : f32 to vector<16x32xf32>
    %17 = arith.addf %16, %15 : vector<16x32xf32>
    %18 = arith.mulf %12, %17 : vector<16x32xf32>
    %cst_13 = arith.constant dense<0.000000e+00> : vector<16xf32>
    %19 = vector.multi_reduction <add>, %18, %cst_13 [1] : vector<16x32xf32> to vector<16xf32>
    %20 = vector.shape_cast %19 : vector<16xf32> to vector<16x1xf32>
    %cst_14 = arith.constant 3.200000e+01 : f32
    %21 = vector.broadcast %cst_14 : f32 to vector<16x1xf32>
    %22 = arith.divf %20, %21 : vector<16x1xf32>
    %23 = vector.broadcast %22 : vector<16x1xf32> to vector<16x32xf32>
    %24 = arith.subf %18, %23 : vector<16x32xf32>
    %25 = arith.mulf %24, %24 : vector<16x32xf32>
    %cst_15 = arith.constant dense<0.000000e+00> : vector<16xf32>
    %26 = vector.multi_reduction <add>, %25, %cst_15 [1] : vector<16x32xf32> to vector<16xf32>
    %27 = vector.shape_cast %26 : vector<16xf32> to vector<16x1xf32>
    %cst_16 = arith.constant 3.200000e+01 : f32
    %28 = vector.broadcast %cst_16 : f32 to vector<16x1xf32>
    %29 = arith.divf %27, %28 : vector<16x1xf32>
    %cst_17 = arith.constant 9.99999996E-13 : f32
    %30 = vector.broadcast %cst_17 : f32 to vector<16x1xf32>
    %31 = arith.addf %29, %30 : vector<16x1xf32>
    %32 = math.rsqrt %31 : vector<16x1xf32>
    %33 = vector.broadcast %32 : vector<16x1xf32> to vector<16x32xf32>
    %34 = arith.mulf %24, %33 : vector<16x32xf32>
    %35 = vector.broadcast %2 : vector<1x32xf32> to vector<16x32xf32>
    %36 = arith.mulf %34, %35 : vector<16x32xf32>
    %37 = vector.broadcast %3 : vector<1x32xf32> to vector<16x32xf32>
    %38 = arith.addf %36, %37 : vector<16x32xf32>
    %c0_18 = arith.constant 0 : index
    %c0_19 = arith.constant 0 : index
    %39 = vector.load %arg4[%c0_18, %c0_19] : memref<32x32xf32, #tpu.memory_space<vmem>>, vector<32x32xf32>
    %cst_20 = arith.constant dense<0.000000e+00> : vector<16x32xf32>
    %40 = tpu.matmul %38, %39, %cst_20 {dimension_numbers = #tpu.dot_dimension_numbers<[1], [0], [0], [1], [0, 0, 1, 1], [], []>} : vector<16x32xf32>, vector<32x32xf32>, vector<16x32xf32> -> vector<16x32xf32>
    %41 = vector.broadcast %4 : vector<1x32xf32> to vector<16x32xf32>
    %42 = arith.addf %40, %41 : vector<16x32xf32>
    %cst_21 = arith.constant 5.000000e-01 : f32
    %43 = vector.broadcast %cst_21 : f32 to vector<16x32xf32>
    %44 = arith.mulf %43, %42 : vector<16x32xf32>
    %cst_22 = arith.constant 0.707106769 : f32
    %45 = vector.broadcast %cst_22 : f32 to vector<16x32xf32>
    %46 = arith.mulf %42, %45 : vector<16x32xf32>
    %47 = math.erf %46 : vector<16x32xf32>
    %cst_23 = arith.constant 1.000000e+00 : f32
    %48 = vector.broadcast %cst_23 : f32 to vector<16x32xf32>
    %49 = arith.addf %48, %47 : vector<16x32xf32>
    %50 = arith.mulf %44, %49 : vector<16x32xf32>
    %cst_24 = arith.constant dense<0.000000e+00> : vector<16xf32>
    %51 = vector.multi_reduction <add>, %50, %cst_24 [1] : vector<16x32xf32> to vector<16xf32>
    %52 = vector.shape_cast %51 : vector<16xf32> to vector<16x1xf32>
    %cst_25 = arith.constant 3.200000e+01 : f32
    %53 = vector.broadcast %cst_25 : f32 to vector<16x1xf32>
    %54 = arith.divf %52, %53 : vector<16x1xf32>
    %55 = vector.broadcast %54 : vector<16x1xf32> to vector<16x32xf32>
    %56 = arith.subf %50, %55 : vector<16x32xf32>
    %57 = arith.mulf %56, %56 : vector<16x32xf32>
    %cst_26 = arith.constant dense<0.000000e+00> : vector<16xf32>
    %58 = vector.multi_reduction <add>, %57, %cst_26 [1] : vector<16x32xf32> to vector<16xf32>
    %59 = vector.shape_cast %58 : vector<16xf32> to vector<16x1xf32>
    %cst_27 = arith.constant 3.200000e+01 : f32
    %60 = vector.broadcast %cst_27 : f32 to vector<16x1xf32>
    %61 = arith.divf %59, %60 : vector<16x1xf32>
    %cst_28 = arith.constant 9.99999996E-13 : f32
    %62 = vector.broadcast %cst_28 : f32 to vector<16x1xf32>
    %63 = arith.addf %61, %62 : vector<16x1xf32>
    %64 = math.rsqrt %63 : vector<16x1xf32>
    %65 = vector.broadcast %64 : vector<16x1xf32> to vector<16x32xf32>
    %66 = arith.mulf %56, %65 : vector<16x32xf32>
    %67 = vector.broadcast %5 : vector<1x32xf32> to vector<16x32xf32>
    %68 = arith.mulf %66, %67 : vector<16x32xf32>
    %69 = vector.broadcast %6 : vector<1x32xf32> to vector<16x32xf32>
    %70 = arith.addf %68, %69 : vector<16x32xf32>
    %c0_29 = arith.constant 0 : index
    %c0_30 = arith.constant 0 : index
    %71 = vector.load %arg5[%c0_29, %c0_30] : memref<16x32xf32, #tpu.memory_space<vmem>>, vector<16x32xf32>
    tpu.vector_store %arg5[%c0_29, %c0_30], %70 {strides = array<i32>} : memref<16x32xf32, #tpu.memory_space<vmem>>, vector<16x32xf32>,
    return
  }
  func.func @transform_0(%arg0: i32) -> (i32, i32) {
    %c0_i32 = arith.constant 0 : i32
    %c0_i32_0 = arith.constant 0 : i32
    return %arg0, %c0_i32 : i32, i32
  }
  func.func @transform_1(%arg0: i32) -> (i32, i32) {
    %c0_i32 = arith.constant 0 : i32
    %c0_i32_0 = arith.constant 0 : i32
    %c0_i32_1 = arith.constant 0 : i32
    return %c0_i32, %c0_i32_0 : i32, i32
  }
  func.func @transform_2(%arg0: i32) -> (i32, i32) {
    %c0_i32 = arith.constant 0 : i32
    %c0_i32_0 = arith.constant 0 : i32
    %c0_i32_1 = arith.constant 0 : i32
    return %c0_i32, %c0_i32_0 : i32, i32
  }
  func.func @transform_3(%arg0: i32) -> (i32, i32) {
    %c0_i32 = arith.constant 0 : i32
    %c0_i32_0 = arith.constant 0 : i32
    %c0_i32_1 = arith.constant 0 : i32
    return %c0_i32, %c0_i32_0 : i32, i32
  }
  func.func @transform_4(%arg0: i32) -> (i32, i32) {
    %c0_i32 = arith.constant 0 : i32
    %c0_i32_0 = arith.constant 0 : i32
    return %arg0, %c0_i32 : i32, i32
  }
}

</mosaic_0001>

<llo_original>
// kernel: tpu_custom_call.1
$region0: #{tpu_custom_call.1}
  #allocation0 [shape = 'u32[]', space=smem, size = 0x4, offset = 0x4, fixed_abs, tag = 'smem constant byte address 0x4 - core index']
  #allocation1 [shape = 'u32[72,128]{1,0:T(1,128)}', space=vmem, size = 0x9000, scoped, tag = 'internal scratch']
  %s0 = inlined_call_operand.vmem [shape: f32[16,96], index: 0, kind: input, shape index: {}]
  %s1 = inlined_call_operand.vmem [shape: f32[96,32], index: 1, kind: input, shape index: {}]
  %s2 = inlined_call_operand.vmem [shape: f32[8,32], index: 2, kind: input, shape index: {}]
  %s3 = inlined_call_operand.vmem [shape: f32[32,32], index: 3, kind: input, shape index: {}]
  %s4 = inlined_call_operand.hbm [shape: f32[16,32], index: 4, kind: output, shape index: {}]
  %s5 = sld [smem:[#allocation0]]
  $region26: #{tpu_custom_call.1} parent=0
    _
  %s7 = ssub.s32 1, %s5
  %s8 = scalar_select 0, %s7, %s5
  $region1: #{tpu_custom_call.1} parent=0
    #allocation2 [shape = 'u8[8192]{0}', space=vmem, size = 0x2000, scoped, tag = 'output window, operand 0, single buffered']
    #allocation3 [shape = 's32[1]{0}', space=sflag, size = 0x4, scoped, tag = 'scoped memory for tpu_custom_call.1']
    %9 = vsyncpa [#allocation3], 0
    // Predicated region
    $region2: #{tpu_custom_call.1} parent=1 // pred_check
      _
    $region3: #{tpu_custom_call.1} parent=1 // pred_check_branch
      %11 = sbr.rel (0) target = $region5
    $region4: #{tpu_custom_call.1} parent=1 // pred_region
      _
    $region5: #{tpu_custom_call.1} parent=1 // pred_fallthru
      _
    // Predicated region
    $region6: #{tpu_custom_call.1} parent=1 // pred_check
      _
    $region7: #{tpu_custom_call.1} parent=1 // pred_check_branch
      %13 = sbr.rel (0) target = $region9
    $region8: #{tpu_custom_call.1} parent=1 // pred_region
      _
    $region9: #{tpu_custom_call.1} parent=1 // pred_fallthru
      _
    // Predicated region
    $region10: #{tpu_custom_call.1} parent=1 // pred_check
      _
    $region11: #{tpu_custom_call.1} parent=1 // pred_check_branch
      %15 = sbr.rel (0) target = $region13
    $region12: #{tpu_custom_call.1} parent=1 // pred_region
      _
    $region13: #{tpu_custom_call.1} parent=1 // pred_fallthru
      _
    // Predicated region
    $region14: #{tpu_custom_call.1} parent=1 // pred_check
      _
    $region15: #{tpu_custom_call.1} parent=1 // pred_check_branch
      %17 = sbr.rel (0) target = $region17
    $region16: #{tpu_custom_call.1} parent=1 // pred_region
      _
    $region17: #{tpu_custom_call.1} parent=1 // pred_fallthru
      _
    %v18 = vld [vmem:[%s0] sm:$0xff]
    %v19 = vld [vmem:[%s0 + $0x8] sm:$0xff]
    %v20 = vld [vmem:[%s2] sm:$0x1]
    %v21 = vld [vmem:[%s2 + $0x1] sm:$0x1]
    %v22 = vld [vmem:[%s2 + $0x2] sm:$0x1]
    %v23 = vld [vmem:[%s2 + $0x3] sm:$0x1]
    %v24 = vld [vmem:[%s2 + $0x4] sm:$0x1]
    %v25 = vld [vmem:[%s2 + $0x5] sm:$0x1]
    %v26 = vld [vmem:[%s1] sm:$0xff]
    %v27 = vld [vmem:[%s1 + $0x8] sm:$0xff]
    %v28 = vld [vmem:[%s1 + $0x10] sm:$0xff]
    %v29 = vld [vmem:[%s1 + $0x18] sm:$0xff]
    %v30 = vld [vmem:[%s1 + $0x20] sm:$0xff]
    %v31 = vld [vmem:[%s1 + $0x28] sm:$0xff]
    %v32 = vld [vmem:[%s1 + $0x30] sm:$0xff]
    %v33 = vld [vmem:[%s1 + $0x38] sm:$0xff]
    %v34 = vld [vmem:[%s1 + $0x40] sm:$0xff]
    %v35 = vld [vmem:[%s1 + $0x48] sm:$0xff]
    %v36 = vld [vmem:[%s1 + $0x50] sm:$0xff]
    %v37 = vld [vmem:[%s1 + $0x58] sm:$0xff]
    %v38 = vperm.slane %v20, 0
    %vm39 = vcmask 785408
    %v41 = vsel %vm39, %v18, 0
    %v44 = vsel %vm39, %v19, 0
    %46 = vmatpush.msra.mxu0 0.0
    %47 = vmatpush.msra.mxu0 0.0
    %48 = vmatpush.msra.mxu0 0.0
    %49 = vmatpush.msra.mxu0 0.0
    %50 = vmatpush.msra.mxu0 %v37
    %51 = vmatpush.msra.mxu0 %v36
    %52 = vmatpush.msra.mxu0 %v35
    %53 = vmatpush.msra.mxu0 %v34
    %54 = vmatpush.msra.mxu0 %v33
    %55 = vmatpush.msra.mxu0 %v32
    %56 = vmatpush.msra.mxu0 %v31
    %57 = vmatpush.msra.mxu0 %v30
    %58 = vmatpush.msra.mxu0 %v29
    %59 = vmatpush.msra.mxu0 %v28
    %60 = vmatpush.msra.mxu0 %v27
    %61 = vmatpush.msra.mxu0 %v26
    %62 = vmatmul.f32.gmra.mxu0 %v41
    %v63 = vpop.f32.mrf.mxu0
    %v64 = vadd.f32 %v38, %v63
    %65 = vmatmul.f32.gmra.mxu0 %v44
    %v66 = vpop.f32.mrf.mxu0
    %v67 = vadd.f32 %v38, %v66
    %68 = vdwg.mxu0
    %v69 = vmul.f32 %v64, 0.5
    %v70 = vmul.f32 %v67, 0.5
    %v71 = vmul.f32 %v64, 0.70710677
    %v72 = vmul.f32 %v67, 0.70710677
    %v73 = vmul.f32 %v71, %v71
    %v74 = vmin.f32 16.0, %v73
    %v75 = vmul.f32 %v74, 2.1237322e-06
    %v76 = vadd.f32 %v75, 0.00028619796
    %v77 = vmul.f32 %v74, %v76
    %v78 = vadd.f32 %v77, 0.0036580483
    %v79 = vmul.f32 %v74, %v78
    %v80 = vadd.f32 %v79, 0.05243302
    %v81 = vmul.f32 %v74, %v80
    %v82 = vadd.f32 %v81, 0.18741608
    %v83 = vmul.f32 %v74, %v82
    %v84 = vadd.f32 %v83, 1.1283791
    %v85 = vmul.f32 %v71, %v84
    %v86 = vmul.f32 %v74, 3.8918573e-05
    %v87 = vadd.f32 %v86, 0.001143296
    %v88 = vmul.f32 %v74, %v87
    %v89 = vadd.f32 %v88, 0.014752088
    %v90 = vmul.f32 %v74, %v89
    %v91 = vadd.f32 %v90, 0.112945676
    %v92 = vmul.f32 %v74, %v91
    %v93 = vadd.f32 %v92, 0.4994258
    %v94 = vmul.f32 %v74, %v93
    %v95 = vadd.f32 %v94, 1.0
    %v96 = vrcp.pop %v95
    %v97 = vmul.f32 %v95, %v96
    %v98 = vsub.f32 1.0, %v97
    %v99 = vmul.f32 %v96, %v98
    %v100 = vadd.f32 %v96, %v99
    %vm101 = vweird.f32 %v95
    %vm102 = vweird.f32 %v96
    %vm103 = vmor %vm101, %vm102
    %v104 = vsel %vm103, %v96, %v100
    %v105 = vand.u32 2147483647, %v95
    %vm106 = vcmp.eq.f32.partialorder %v105, 8.507059e+37
    %v107 = vand.u32 %v95, 2147483648
    %v108 = vor.u32 1.1754944e-38, %v107
    %v109 = vsel %vm106, %v108, %v104
    %v110 = vmul.f32 %v85, %v109
    %v111 = vmin.f32 %v110, 1.0
    %v112 = vmax.f32 %v111, -1.0
    %v113 = vmul.f32 %v72, %v72
    %v114 = vmin.f32 16.0, %v113
    %v115 = vmul.f32 %v114, 2.1237322e-06
    %v116 = vadd.f32 %v115, 0.00028619796
    %v117 = vmul.f32 %v114, %v116
    %v118 = vadd.f32 %v117, 0.0036580483
    %v119 = vmul.f32 %v114, %v118
    %v120 = vadd.f32 %v119, 0.05243302
    %v121 = vmul.f32 %v114, %v120
    %v122 = vadd.f32 %v121, 0.18741608
    %v123 = vmul.f32 %v114, %v122
    %v124 = vadd.f32 %v123, 1.1283791
    %v125 = vmul.f32 %v72, %v124
    %v126 = vmul.f32 %v114, 3.8918573e-05
    %v127 = vadd.f32 %v126, 0.001143296
    %v128 = vmul.f32 %v114, %v127
    %v129 = vadd.f32 %v128, 0.014752088
    %v130 = vmul.f32 %v114, %v129
    %v131 = vadd.f32 %v130, 0.112945676
    %v132 = vmul.f32 %v114, %v131
    %v133 = vadd.f32 %v132, 0.4994258
    %v134 = vmul.f32 %v114, %v133
    %v135 = vadd.f32 %v134, 1.0
    %v136 = vrcp.pop %v135
    %v137 = vmul.f32 %v135, %v136
    %v138 = vsub.f32 1.0, %v137
    %v139 = vmul.f32 %v136, %v138
    %v140 = vadd.f32 %v136, %v139
    %vm141 = vweird.f32 %v135
    %vm142 = vweird.f32 %v136
    %vm143 = vmor %vm141, %vm142
    %v144 = vsel %vm143, %v136, %v140
    %v145 = vand.u32 2147483647, %v135
    %vm146 = vcmp.eq.f32.partialorder %v145, 8.507059e+37
    %v147 = vand.u32 %v135, 2147483648
    %v148 = vor.u32 1.1754944e-38, %v147
    %v149 = vsel %vm146, %v148, %v144
    %v150 = vmul.f32 %v125, %v149
    %v151 = vmin.f32 %v150, 1.0
    %v152 = vmax.f32 %v151, -1.0
    %v153 = vadd.f32 %v112, 1.0
    %v154 = vadd.f32 %v152, 1.0
    %v155 = vmul.f32 %v69, %v153
    %v156 = vmul.f32 %v70, %v154
    %vm157 = vcmask 261120
    %v158 = vsel %vm157, %v155, 0.0
    %159 = vadd.xlane.f32.xlu0 %v158
    %v160 = vpop.xlane.xlu0 %159
    %v161 = vsel %vm157, %v156, 0.0
    %162 = vadd.xlane.f32.xlu0 %v161
    %v163 = vpop.xlane.xlu0 %162
    %v164 = vrcp.pop 32.0
    %v165 = vmul.f32 32.0, %v164
    %v166 = vsub.f32 1.0, %v165
    %v167 = vmul.f32 %v164, %v166
    %v168 = vadd.f32 %v164, %v167
    %vm169 = vweird.f32 %v164
    %v170 = vsel %vm169, %v164, %v168
    %v171 = vmul.f32 %v160, %v170
    %v172 = vmul.f32 %v163, %v170
    %v173 = vsub.f32 %v155, %v171
    %v174 = vsub.f32 %v156, %v172
    %v175 = vmul.f32 %v173, %v173
    %v176 = vmul.f32 %v174, %v174
    %v177 = vsel %vm157, %v175, 0.0
    %178 = vadd.xlane.f32.xlu0 %v177
    %v179 = vpop.xlane.xlu0 %178
    %v180 = vsel %vm157, %v176, 0.0
    %181 = vadd.xlane.f32.xlu0 %v180
    %v182 = vpop.xlane.xlu0 %181
    %v183 = vmul.f32 %v179, %v170
    %v184 = vmul.f32 %v182, %v170
    %v185 = vadd.f32 %v183, 1e-12
    %v186 = vadd.f32 %v184, 1e-12
    %v187 = vrsqrt.pop %v185
    %v188 = vmul.f32 %v187, %v185
    %v189 = vmul.f32 %v188, %v187
    %v190 = vmul.f32 0.5, %v189
    %v191 = vsub.f32 1.5, %v190
    %v192 = vmul.f32 %v187, %v191
    %vm193 = vweird.f32 %v185
    %vm194 = vweird.f32 %v187
    %vm195 = vmor %vm193, %vm194
    %v196 = vsel %vm195, %v187, %v192
    %v197 = vrsqrt.pop %v186
    %v198 = vmul.f32 %v197, %v186
    %v199 = vmul.f32 %v198, %v197
    %v200 = vmul.f32 0.5, %v199
    %v201 = vsub.f32 1.5, %v200
    %v202 = vmul.f32 %v197, %v201
    %vm203 = vweird.f32 %v186
    %vm204 = vweird.f32 %v197
    %vm205 = vmor %vm203, %vm204
    %v206 = vsel %vm205, %v197, %v202
    %v207 = vmul.f32 %v173, %v196
    %v208 = vmul.f32 %v174, %v206
    %v209 = vperm.slane %v21, 0
    %v210 = vmul.f32 %v207, %v209
    %v211 = vmul.f32 %v208, %v209
    %v212 = vperm.slane %v22, 0
    %v213 = vadd.f32 %v210, %v212
    %v214 = vadd.f32 %v211, %v212
    %v215 = vld [vmem:[%s3] sm:$0xff]
    %v216 = vld [vmem:[%s3 + $0x8] sm:$0xff]
    %v217 = vld [vmem:[%s3 + $0x10] sm:$0xff]
    %v218 = vld [vmem:[%s3 + $0x18] sm:$0xff]
    %v219 = vperm.slane %v23, 0
    %v221 = vsel %vm157, %v213, 0
    %v224 = vsel %vm157, %v214, 0
    %226 = vmatpush.msra.mxu0 0.0
    %227 = vmatpush.msra.mxu0 0.0
    %228 = vmatpush.msra.mxu0 0.0
    %229 = vmatpush.msra.mxu0 0.0
    %230 = vmatpush.msra.mxu0 0.0
    %231 = vmatpush.msra.mxu0 0.0
    %232 = vmatpush.msra.mxu0 0.0
    %233 = vmatpush.msra.mxu0 0.0
    %234 = vmatpush.msra.mxu0 0.0
    %235 = vmatpush.msra.mxu0 0.0
    %236 = vmatpush.msra.mxu0 0.0
    %237 = vmatpush.msra.mxu0 0.0
    %238 = vmatpush.msra.mxu0 %v218
    %239 = vmatpush.msra.mxu0 %v217
    %240 = vmatpush.msra.mxu0 %v216
    %241 = vmatpush.msra.mxu0 %v215
    %242 = vmatmul.f32.gmra.mxu0 %v221
    %v243 = vpop.f32.mrf.mxu0
    %v244 = vadd.f32 %v219, %v243
    %245 = vmatmul.f32.gmra.mxu0 %v224
    %v246 = vpop.f32.mrf.mxu0
    %v247 = vadd.f32 %v219, %v246
    %248 = vdwg.mxu0
    %v249 = vmul.f32 %v244, 0.5
    %v250 = vmul.f32 %v247, 0.5
    %v251 = vmul.f32 %v244, 0.70710677
    %v252 = vmul.f32 %v247, 0.70710677
    %v253 = vmul.f32 %v251, %v251
    %v254 = vmin.f32 16.0, %v253
    %v255 = vmul.f32 %v254, 2.1237322e-06
    %v256 = vadd.f32 %v255, 0.00028619796
    %v257 = vmul.f32 %v254, %v256
    %v258 = vadd.f32 %v257, 0.0036580483
    %v259 = vmul.f32 %v254, %v258
    %v260 = vadd.f32 %v259, 0.05243302
    %v261 = vmul.f32 %v254, %v260
    %v262 = vadd.f32 %v261, 0.18741608
    %v263 = vmul.f32 %v254, %v262
    %v264 = vadd.f32 %v263, 1.1283791
    %v265 = vmul.f32 %v251, %v264
    %v266 = vmul.f32 %v254, 3.8918573e-05
    %v267 = vadd.f32 %v266, 0.001143296
    %v268 = vmul.f32 %v254, %v267
    %v269 = vadd.f32 %v268, 0.014752088
    %v270 = vmul.f32 %v254, %v269
    %v271 = vadd.f32 %v270, 0.112945676
    %v272 = vmul.f32 %v254, %v271
    %v273 = vadd.f32 %v272, 0.4994258
    %v274 = vmul.f32 %v254, %v273
    %v275 = vadd.f32 %v274, 1.0
    %v276 = vrcp.pop %v275
    %v277 = vmul.f32 %v275, %v276
    %v278 = vsub.f32 1.0, %v277
    %v279 = vmul.f32 %v276, %v278
    %v280 = vadd.f32 %v276, %v279
    %vm281 = vweird.f32 %v275
    %vm282 = vweird.f32 %v276
    %vm283 = vmor %vm281, %vm282
    %v284 = vsel %vm283, %v276, %v280
    %v285 = vand.u32 2147483647, %v275
    %vm286 = vcmp.eq.f32.partialorder %v285, 8.507059e+37
    %v287 = vand.u32 %v275, 2147483648
    %v288 = vor.u32 1.1754944e-38, %v287
    %v289 = vsel %vm286, %v288, %v284
    %v290 = vmul.f32 %v265, %v289
    %v291 = vmin.f32 %v290, 1.0
    %v292 = vmax.f32 %v291, -1.0
    %v293 = vmul.f32 %v252, %v252
    %v294 = vmin.f32 16.0, %v293
    %v295 = vmul.f32 %v294, 2.1237322e-06
    %v296 = vadd.f32 %v295, 0.00028619796
    %v297 = vmul.f32 %v294, %v296
    %v298 = vadd.f32 %v297, 0.0036580483
    %v299 = vmul.f32 %v294, %v298
    %v300 = vadd.f32 %v299, 0.05243302
    %v301 = vmul.f32 %v294, %v300
    %v302 = vadd.f32 %v301, 0.18741608
    %v303 = vmul.f32 %v294, %v302
    %v304 = vadd.f32 %v303, 1.1283791
    %v305 = vmul.f32 %v252, %v304
    %v306 = vmul.f32 %v294, 3.8918573e-05
    %v307 = vadd.f32 %v306, 0.001143296
    %v308 = vmul.f32 %v294, %v307
    %v309 = vadd.f32 %v308, 0.014752088
    %v310 = vmul.f32 %v294, %v309
    %v311 = vadd.f32 %v310, 0.112945676
    %v312 = vmul.f32 %v294, %v311
    %v313 = vadd.f32 %v312, 0.4994258
    %v314 = vmul.f32 %v294, %v313
    %v315 = vadd.f32 %v314, 1.0
    %v316 = vrcp.pop %v315
    %v317 = vmul.f32 %v315, %v316
    %v318 = vsub.f32 1.0, %v317
    %v319 = vmul.f32 %v316, %v318
    %v320 = vadd.f32 %v316, %v319
    %vm321 = vweird.f32 %v315
    %vm322 = vweird.f32 %v316
    %vm323 = vmor %vm321, %vm322
    %v324 = vsel %vm323, %v316, %v320
    %v325 = vand.u32 2147483647, %v315
    %vm326 = vcmp.eq.f32.partialorder %v325, 8.507059e+37
    %v327 = vand.u32 %v315, 2147483648
    %v328 = vor.u32 1.1754944e-38, %v327
    %v329 = vsel %vm326, %v328, %v324
    %v330 = vmul.f32 %v305, %v329
    %v331 = vmin.f32 %v330, 1.0
    %v332 = vmax.f32 %v331, -1.0
    %v333 = vadd.f32 %v292, 1.0
    %v334 = vadd.f32 %v332, 1.0
    %v335 = vmul.f32 %v249, %v333
    %v336 = vmul.f32 %v250, %v334
    %v337 = vsel %vm157, %v335, 0.0
    %338 = vadd.xlane.f32.xlu0 %v337
    %v339 = vpop.xlane.xlu0 %338
    %v340 = vsel %vm157, %v336, 0.0
    %341 = vadd.xlane.f32.xlu0 %v340
    %v342 = vpop.xlane.xlu0 %341
    %v343 = vmul.f32 %v339, %v170
    %v344 = vmul.f32 %v342, %v170
    %v345 = vsub.f32 %v335, %v343
    %v346 = vsub.f32 %v336, %v344
    %v347 = vmul.f32 %v345, %v345
    %v348 = vmul.f32 %v346, %v346
    %v349 = vsel %vm157, %v347, 0.0
    %350 = vadd.xlane.f32.xlu0 %v349
    %v351 = vpop.xlane.xlu0 %350
    %v352 = vsel %vm157, %v348, 0.0
    %353 = vadd.xlane.f32.xlu0 %v352
    %v354 = vpop.xlane.xlu0 %353
    %v355 = vmul.f32 %v351, %v170
    %v356 = vmul.f32 %v354, %v170
    %v357 = vadd.f32 %v355, 1e-12
    %v358 = vadd.f32 %v356, 1e-12
    %v359 = vrsqrt.pop %v357
    %v360 = vmul.f32 %v359, %v357
    %v361 = vmul.f32 %v360, %v359
    %v362 = vmul.f32 0.5, %v361
    %v363 = vsub.f32 1.5, %v362
    %v364 = vmul.f32 %v359, %v363
    %vm365 = vweird.f32 %v357
    %vm366 = vweird.f32 %v359
    %vm367 = vmor %vm365, %vm366
    %v368 = vsel %vm367, %v359, %v364
    %v369 = vrsqrt.pop %v358
    %v370 = vmul.f32 %v369, %v358
    %v371 = vmul.f32 %v370, %v369
    %v372 = vmul.f32 0.5, %v371
    %v373 = vsub.f32 1.5, %v372
    %v374 = vmul.f32 %v369, %v373
    %vm375 = vweird.f32 %v358
    %vm376 = vweird.f32 %v369
    %vm377 = vmor %vm375, %vm376
    %v378 = vsel %vm377, %v369, %v374
    %v379 = vmul.f32 %v345, %v368
    %v380 = vmul.f32 %v346, %v378
    %v381 = vperm.slane %v24, 0
    %v382 = vmul.f32 %v379, %v381
    %v383 = vmul.f32 %v380, %v381
    %v384 = vperm.slane %v25, 0
    %v385 = vadd.f32 %v382, %v384
    %v386 = vadd.f32 %v383, %v384
    %387 = vst.msk [vmem:[#allocation2] sm:$0xff] %vm157, %v385
    %388 = vst.msk [vmem:[#allocation2 + $0x8] sm:$0xff] %vm157, %v386
    // Predicated region
    $region18: #{tpu_custom_call.1} parent=1 // pred_check
      _
    $region19: #{tpu_custom_call.1} parent=1 // pred_check_branch
      %390 = sbr.rel (0) target = $region21
    $region20: #{tpu_custom_call.1} parent=1 // pred_region
      %392 = vsyncadd [#allocation3], 0
      %s393 = sshll.u32 [#allocation2], 4
      %s394 = int_to_ptr.vmem [resolvable:$true] %s393
      %s395 = sshll.u32 %s4, 4
      %s396 = int_to_ptr.hbm [resolvable:$true] %s395
      %401 = dma.vmem_to_hbm [thread:$0]  %s394, 256, %s396, [#allocation3], 128, 128, 8
    $region21: #{tpu_custom_call.1} parent=1 // pred_fallthru
      _
    // Predicated region
    $region22: #{tpu_custom_call.1} parent=1 // pred_check
      _
    $region23: #{tpu_custom_call.1} parent=1 // pred_check_branch
      %403 = sbr.rel (0) target = $region25
    $region24: #{tpu_custom_call.1} parent=1 // pred_region
      %405 = dma.done [#allocation3], 256
    $region25: #{tpu_custom_call.1} parent=1 // pred_fallthru
      _
    %406 = vsyncpa [#allocation3], 1

// kernel: tpu_custom_call.1
$region0: #{tpu_custom_call.1}
  #allocation0 [shape = 'u32[]', space=smem, size = 0x4, offset = 0x4, fixed_abs, tag = 'smem constant byte address 0x4 - core index']
  #allocation1 [shape = 'u32[72,128]{1,0:T(1,128)}', space=vmem, size = 0x9000, scoped, tag = 'internal scratch']
  %s0 = inlined_call_operand.vmem [shape: f32[16,96], index: 0, kind: input, shape index: {}]
  %s1 = inlined_call_operand.vmem [shape: f32[96,32], index: 1, kind: input, shape index: {}]
  %s2 = inlined_call_operand.vmem [shape: f32[8,32], index: 2, kind: input, shape index: {}]
  %s3 = inlined_call_operand.vmem [shape: f32[32,32], index: 3, kind: input, shape index: {}]
  %s4 = inlined_call_operand.hbm [shape: f32[16,32], index: 4, kind: output, shape index: {}]
  %s5 = sld [smem:[#allocation0]]
  $region26: #{tpu_custom_call.1} parent=0
    _
  %s7 = ssub.s32 1, %s5
  %s8 = scalar_select 0, %s7, %s5
  $region1: #{tpu_custom_call.1} parent=0
    #allocation2 [shape = 'u8[8192]{0}', space=vmem, size = 0x2000, scoped, tag = 'output window, operand 0, single buffered']
    #allocation3 [shape = 's32[1]{0}', space=sflag, size = 0x4, scoped, tag = 'scoped memory for tpu_custom_call.1']
    %9 = vsyncpa [#allocation3], 0
    // Predicated region
    $region2: #{tpu_custom_call.1} parent=1 // pred_check
      _
    $region3: #{tpu_custom_call.1} parent=1 // pred_check_branch
      %11 = sbr.rel (0) target = $region5
    $region4: #{tpu_custom_call.1} parent=1 // pred_region
      _
    $region5: #{tpu_custom_call.1} parent=1 // pred_fallthru
      _
    // Predicated region
    $region6: #{tpu_custom_call.1} parent=1 // pred_check
      _
    $region7: #{tpu_custom_call.1} parent=1 // pred_check_branch
      %13 = sbr.rel (0) target = $region9
    $region8: #{tpu_custom_call.1} parent=1 // pred_region
      _
    $region9: #{tpu_custom_call.1} parent=1 // pred_fallthru
      _
    // Predicated region
    $region10: #{tpu_custom_call.1} parent=1 // pred_check
      _
    $region11: #{tpu_custom_call.1} parent=1 // pred_check_branch
      %15 = sbr.rel (0) target = $region13
    $region12: #{tpu_custom_call.1} parent=1 // pred_region
      _
    $region13: #{tpu_custom_call.1} parent=1 // pred_fallthru
      _
    // Predicated region
    $region14: #{tpu_custom_call.1} parent=1 // pred_check
      _
    $region15: #{tpu_custom_call.1} parent=1 // pred_check_branch
      %17 = sbr.rel (0) target = $region17
    $region16: #{tpu_custom_call.1} parent=1 // pred_region
      _
    $region17: #{tpu_custom_call.1} parent=1 // pred_fallthru
      _
    %v18 = vld [vmem:[%s0] sm:$0xff]
    %v19 = vld [vmem:[%s0 + $0x8] sm:$0xff]
    %v20 = vld [vmem:[%s2] sm:$0x1]
    %v21 = vld [vmem:[%s2 + $0x1] sm:$0x1]
    %v22 = vld [vmem:[%s2 + $0x2] sm:$0x1]
    %v23 = vld [vmem:[%s2 + $0x3] sm:$0x1]
    %v24 = vld [vmem:[%s2 + $0x4] sm:$0x1]
    %v25 = vld [vmem:[%s2 + $0x5] sm:$0x1]
    %v26 = vld [vmem:[%s1] sm:$0xff]
    %v27 = vld [vmem:[%s1 + $0x8] sm:$0xff]
    %v28 = vld [vmem:[%s1 + $0x10] sm:$0xff]
    %v29 = vld [vmem:[%s1 + $0x18] sm:$0xff]
    %v30 = vld [vmem:[%s1 + $0x20] sm:$0xff]
    %v31 = vld [vmem:[%s1 + $0x28] sm:$0xff]
    %v32 = vld [vmem:[%s1 + $0x30] sm:$0xff]
    %v33 = vld [vmem:[%s1 + $0x38] sm:$0xff]
    %v34 = vld [vmem:[%s1 + $0x40] sm:$0xff]
    %v35 = vld [vmem:[%s1 + $0x48] sm:$0xff]
    %v36 = vld [vmem:[%s1 + $0x50] sm:$0xff]
    %v37 = vld [vmem:[%s1 + $0x58] sm:$0xff]
    %v38 = vperm.slane %v20, 0
    %vm39 = vcmask 785408
    %v41 = vsel %vm39, %v18, 0
    %v44 = vsel %vm39, %v19, 0
    %46 = vmatpush.msra.mxu0 0.0
    %47 = vmatpush.msra.mxu0 0.0
    %48 = vmatpush.msra.mxu0 0.0
    %49 = vmatpush.msra.mxu0 0.0
    %50 = vmatpush.msra.mxu0 %v37
    %51 = vmatpush.msra.mxu0 %v36
    %52 = vmatpush.msra.mxu0 %v35
    %53 = vmatpush.msra.mxu0 %v34
    %54 = vmatpush.msra.mxu0 %v33
    %55 = vmatpush.msra.mxu0 %v32
    %56 = vmatpush.msra.mxu0 %v31
    %57 = vmatpush.msra.mxu0 %v30
    %58 = vmatpush.msra.mxu0 %v29
    %59 = vmatpush.msra.mxu0 %v28
    %60 = vmatpush.msra.mxu0 %v27
    %61 = vmatpush.msra.mxu0 %v26
    %62 = vmatmul.f32.gmra.mxu0 %v41
    %v63 = vpop.f32.mrf.mxu0
    %v64 = vadd.f32 %v38, %v63
    %65 = vmatmul.f32.gmra.mxu0 %v44
    %v66 = vpop.f32.mrf.mxu0
    %v67 = vadd.f32 %v38, %v66
    %68 = vdwg.mxu0
    %v69 = vmul.f32 %v64, 0.5
    %v70 = vmul.f32 %v67, 0.5
    %v71 = vmul.f32 %v64, 0.70710677
    %v72 = vmul.f32 %v67, 0.70710677
    %v73 = vmul.f32 %v71, %v71
    %v74 = vmin.f32 16.0, %v73
    %v75 = vmul.f32 %v74, 2.1237322e-06
    %v76 = vadd.f32 %v75, 0.00028619796
    %v77 = vmul.f32 %v74, %v76
    %v78 = vadd.f32 %v77, 0.0036580483
    %v79 = vmul.f32 %v74, %v78
    %v80 = vadd.f32 %v79, 0.05243302
    %v81 = vmul.f32 %v74, %v80
    %v82 = vadd.f32 %v81, 0.18741608
    %v83 = vmul.f32 %v74, %v82
    %v84 = vadd.f32 %v83, 1.1283791
    %v85 = vmul.f32 %v71, %v84
    %v86 = vmul.f32 %v74, 3.8918573e-05
    %v87 = vadd.f32 %v86, 0.001143296
    %v88 = vmul.f32 %v74, %v87
    %v89 = vadd.f32 %v88, 0.014752088
    %v90 = vmul.f32 %v74, %v89
    %v91 = vadd.f32 %v90, 0.112945676
    %v92 = vmul.f32 %v74, %v91
    %v93 = vadd.f32 %v92, 0.4994258
    %v94 = vmul.f32 %v74, %v93
    %v95 = vadd.f32 %v94, 1.0
    %v96 = vrcp.pop %v95
    %v97 = vmul.f32 %v95, %v96
    %v98 = vsub.f32 1.0, %v97
    %v99 = vmul.f32 %v96, %v98
    %v100 = vadd.f32 %v96, %v99
    %vm101 = vweird.f32 %v95
    %vm102 = vweird.f32 %v96
    %vm103 = vmor %vm101, %vm102
    %v104 = vsel %vm103, %v96, %v100
    %v105 = vand.u32 2147483647, %v95
    %vm106 = vcmp.eq.f32.partialorder %v105, 8.507059e+37
    %v107 = vand.u32 %v95, 2147483648
    %v108 = vor.u32 1.1754944e-38, %v107
    %v109 = vsel %vm106, %v108, %v104
    %v110 = vmul.f32 %v85, %v109
    %v111 = vmin.f32 %v110, 1.0
    %v112 = vmax.f32 %v111, -1.0
    %v113 = vmul.f32 %v72, %v72
    %v114 = vmin.f32 16.0, %v113
    %v115 = vmul.f32 %v114, 2.1237322e-06
    %v116 = vadd.f32 %v115, 0.00028619796
    %v117 = vmul.f32 %v114, %v116
    %v118 = vadd.f32 %v117, 0.0036580483
    %v119 = vmul.f32 %v114, %v118
    %v120 = vadd.f32 %v119, 0.05243302
    %v121 = vmul.f32 %v114, %v120
    %v122 = vadd.f32 %v121, 0.18741608
    %v123 = vmul.f32 %v114, %v122
    %v124 = vadd.f32 %v123, 1.1283791
    %v125 = vmul.f32 %v72, %v124
    %v126 = vmul.f32 %v114, 3.8918573e-05
    %v127 = vadd.f32 %v126, 0.001143296
    %v128 = vmul.f32 %v114, %v127
    %v129 = vadd.f32 %v128, 0.014752088
    %v130 = vmul.f32 %v114, %v129
    %v131 = vadd.f32 %v130, 0.112945676
    %v132 = vmul.f32 %v114, %v131
    %v133 = vadd.f32 %v132, 0.4994258
    %v134 = vmul.f32 %v114, %v133
    %v135 = vadd.f32 %v134, 1.0
    %v136 = vrcp.pop %v135
    %v137 = vmul.f32 %v135, %v136
    %v138 = vsub.f32 1.0, %v137
    %v139 = vmul.f32 %v136, %v138
    %v140 = vadd.f32 %v136, %v139
    %vm141 = vweird.f32 %v135
    %vm142 = vweird.f32 %v136
    %vm143 = vmor %vm141, %vm142
    %v144 = vsel %vm143, %v136, %v140
    %v145 = vand.u32 2147483647, %v135
    %vm146 = vcmp.eq.f32.partialorder %v145, 8.507059e+37
    %v147 = vand.u32 %v135, 2147483648
    %v148 = vor.u32 1.1754944e-38, %v147
    %v149 = vsel %vm146, %v148, %v144
    %v150 = vmul.f32 %v125, %v149
    %v151 = vmin.f32 %v150, 1.0
    %v152 = vmax.f32 %v151, -1.0
    %v153 = vadd.f32 %v112, 1.0
    %v154 = vadd.f32 %v152, 1.0
    %v155 = vmul.f32 %v69, %v153
    %v156 = vmul.f32 %v70, %v154
    %vm157 = vcmask 261120
    %v158 = vsel %vm157, %v155, 0.0
    %159 = vadd.xlane.f32.xlu0 %v158
    %v160 = vpop.xlane.xlu0 %159
    %v161 = vsel %vm157, %v156, 0.0
    %162 = vadd.xlane.f32.xlu0 %v161
    %v163 = vpop.xlane.xlu0 %162
    %v164 = vrcp.pop 32.0
    %v165 = vmul.f32 32.0, %v164
    %v166 = vsub.f32 1.0, %v165
    %v167 = vmul.f32 %v164, %v166
    %v168 = vadd.f32 %v164, %v167
    %vm169 = vweird.f32 %v164
    %v170 = vsel %vm169, %v164, %v168
    %v171 = vmul.f32 %v160, %v170
    %v172 = vmul.f32 %v163, %v170
    %v173 = vsub.f32 %v155, %v171
    %v174 = vsub.f32 %v156, %v172
    %v175 = vmul.f32 %v173, %v173
    %v176 = vmul.f32 %v174, %v174
    %v177 = vsel %vm157, %v175, 0.0
    %178 = vadd.xlane.f32.xlu0 %v177
    %v179 = vpop.xlane.xlu0 %178
    %v180 = vsel %vm157, %v176, 0.0
    %181 = vadd.xlane.f32.xlu0 %v180
    %v182 = vpop.xlane.xlu0 %181
    %v183 = vmul.f32 %v179, %v170
    %v184 = vmul.f32 %v182, %v170
    %v185 = vadd.f32 %v183, 1e-12
    %v186 = vadd.f32 %v184, 1e-12
    %v187 = vrsqrt.pop %v185
    %v188 = vmul.f32 %v187, %v185
    %v189 = vmul.f32 %v188, %v187
    %v190 = vmul.f32 0.5, %v189
    %v191 = vsub.f32 1.5, %v190
    %v192 = vmul.f32 %v187, %v191
    %vm193 = vweird.f32 %v185
    %vm194 = vweird.f32 %v187
    %vm195 = vmor %vm193, %vm194
    %v196 = vsel %vm195, %v187, %v192
    %v197 = vrsqrt.pop %v186
    %v198 = vmul.f32 %v197, %v186
    %v199 = vmul.f32 %v198, %v197
    %v200 = vmul.f32 0.5, %v199
    %v201 = vsub.f32 1.5, %v200
    %v202 = vmul.f32 %v197, %v201
    %vm203 = vweird.f32 %v186
    %vm204 = vweird.f32 %v197
    %vm205 = vmor %vm203, %vm204
    %v206 = vsel %vm205, %v197, %v202
    %v207 = vmul.f32 %v173, %v196
    %v208 = vmul.f32 %v174, %v206
    %v209 = vperm.slane %v21, 0
    %v210 = vmul.f32 %v207, %v209
    %v211 = vmul.f32 %v208, %v209
    %v212 = vperm.slane %v22, 0
    %v213 = vadd.f32 %v210, %v212
    %v214 = vadd.f32 %v211, %v212
    %v215 = vld [vmem:[%s3] sm:$0xff]
    %v216 = vld [vmem:[%s3 + $0x8] sm:$0xff]
    %v217 = vld [vmem:[%s3 + $0x10] sm:$0xff]
    %v218 = vld [vmem:[%s3 + $0x18] sm:$0xff]
    %v219 = vperm.slane %v23, 0
    %v221 = vsel %vm157, %v213, 0
    %v224 = vsel %vm157, %v214, 0
    %226 = vmatpush.msra.mxu0 0.0
    %227 = vmatpush.msra.mxu0 0.0
    %228 = vmatpush.msra.mxu0 0.0
    %229 = vmatpush.msra.mxu0 0.0
    %230 = vmatpush.msra.mxu0 0.0
    %231 = vmatpush.msra.mxu0 0.0
    %232 = vmatpush.msra.mxu0 0.0
    %233 = vmatpush.msra.mxu0 0.0
    %234 = vmatpush.msra.mxu0 0.0
    %235 = vmatpush.msra.mxu0 0.0
    %236 = vmatpush.msra.mxu0 0.0
    %237 = vmatpush.msra.mxu0 0.0
    %238 = vmatpush.msra.mxu0 %v218
    %239 = vmatpush.msra.mxu0 %v217
    %240 = vmatpush.msra.mxu0 %v216
    %241 = vmatpush.msra.mxu0 %v215
    %242 = vmatmul.f32.gmra.mxu0 %v221
    %v243 = vpop.f32.mrf.mxu0
    %v244 = vadd.f32 %v219, %v243
    %245 = vmatmul.f32.gmra.mxu0 %v224
    %v246 = vpop.f32.mrf.mxu0
    %v247 = vadd.f32 %v219, %v246
    %248 = vdwg.mxu0
    %v249 = vmul.f32 %v244, 0.5
    %v250 = vmul.f32 %v247, 0.5
    %v251 = vmul.f32 %v244, 0.70710677
    %v252 = vmul.f32 %v247, 0.70710677
    %v253 = vmul.f32 %v251, %v251
    %v254 = vmin.f32 16.0, %v253
    %v255 = vmul.f32 %v254, 2.1237322e-06
    %v256 = vadd.f32 %v255, 0.00028619796
    %v257 = vmul.f32 %v254, %v256
    %v258 = vadd.f32 %v257, 0.0036580483
    %v259 = vmul.f32 %v254, %v258
    %v260 = vadd.f32 %v259, 0.05243302
    %v261 = vmul.f32 %v254, %v260
    %v262 = vadd.f32 %v261, 0.18741608
    %v263 = vmul.f32 %v254, %v262
    %v264 = vadd.f32 %v263, 1.1283791
    %v265 = vmul.f32 %v251, %v264
    %v266 = vmul.f32 %v254, 3.8918573e-05
    %v267 = vadd.f32 %v266, 0.001143296
    %v268 = vmul.f32 %v254, %v267
    %v269 = vadd.f32 %v268, 0.014752088
    %v270 = vmul.f32 %v254, %v269
    %v271 = vadd.f32 %v270, 0.112945676
    %v272 = vmul.f32 %v254, %v271
    %v273 = vadd.f32 %v272, 0.4994258
    %v274 = vmul.f32 %v254, %v273
    %v275 = vadd.f32 %v274, 1.0
    %v276 = vrcp.pop %v275
    %v277 = vmul.f32 %v275, %v276
    %v278 = vsub.f32 1.0, %v277
    %v279 = vmul.f32 %v276, %v278
    %v280 = vadd.f32 %v276, %v279
    %vm281 = vweird.f32 %v275
    %vm282 = vweird.f32 %v276
    %vm283 = vmor %vm281, %vm282
    %v284 = vsel %vm283, %v276, %v280
    %v285 = vand.u32 2147483647, %v275
    %vm286 = vcmp.eq.f32.partialorder %v285, 8.507059e+37
    %v287 = vand.u32 %v275, 2147483648
    %v288 = vor.u32 1.1754944e-38, %v287
    %v289 = vsel %vm286, %v288, %v284
    %v290 = vmul.f32 %v265, %v289
    %v291 = vmin.f32 %v290, 1.0
    %v292 = vmax.f32 %v291, -1.0
    %v293 = vmul.f32 %v252, %v252
    %v294 = vmin.f32 16.0, %v293
    %v295 = vmul.f32 %v294, 2.1237322e-06
    %v296 = vadd.f32 %v295, 0.00028619796
    %v297 = vmul.f32 %v294, %v296
    %v298 = vadd.f32 %v297, 0.0036580483
    %v299 = vmul.f32 %v294, %v298
    %v300 = vadd.f32 %v299, 0.05243302
    %v301 = vmul.f32 %v294, %v300
    %v302 = vadd.f32 %v301, 0.18741608
    %v303 = vmul.f32 %v294, %v302
    %v304 = vadd.f32 %v303, 1.1283791
    %v305 = vmul.f32 %v252, %v304
    %v306 = vmul.f32 %v294, 3.8918573e-05
    %v307 = vadd.f32 %v306, 0.001143296
    %v308 = vmul.f32 %v294, %v307
    %v309 = vadd.f32 %v308, 0.014752088
    %v310 = vmul.f32 %v294, %v309
    %v311 = vadd.f32 %v310, 0.112945676
    %v312 = vmul.f32 %v294, %v311
    %v313 = vadd.f32 %v312, 0.4994258
    %v314 = vmul.f32 %v294, %v313
    %v315 = vadd.f32 %v314, 1.0
    %v316 = vrcp.pop %v315
    %v317 = vmul.f32 %v315, %v316
    %v318 = vsub.f32 1.0, %v317
    %v319 = vmul.f32 %v316, %v318
    %v320 = vadd.f32 %v316, %v319
    %vm321 = vweird.f32 %v315
    %vm322 = vweird.f32 %v316
    %vm323 = vmor %vm321, %vm322
    %v324 = vsel %vm323, %v316, %v320
    %v325 = vand.u32 2147483647, %v315
    %vm326 = vcmp.eq.f32.partialorder %v325, 8.507059e+37
    %v327 = vand.u32 %v315, 2147483648
    %v328 = vor.u32 1.1754944e-38, %v327
    %v329 = vsel %vm326, %v328, %v324
    %v330 = vmul.f32 %v305, %v329
    %v331 = vmin.f32 %v330, 1.0
    %v332 = vmax.f32 %v331, -1.0
    %v333 = vadd.f32 %v292, 1.0
    %v334 = vadd.f32 %v332, 1.0
    %v335 = vmul.f32 %v249, %v333
    %v336 = vmul.f32 %v250, %v334
    %v337 = vsel %vm157, %v335, 0.0
    %338 = vadd.xlane.f32.xlu0 %v337
    %v339 = vpop.xlane.xlu0 %338
    %v340 = vsel %vm157, %v336, 0.0
    %341 = vadd.xlane.f32.xlu0 %v340
    %v342 = vpop.xlane.xlu0 %341
    %v343 = vmul.f32 %v339, %v170
    %v344 = vmul.f32 %v342, %v170
    %v345 = vsub.f32 %v335, %v343
    %v346 = vsub.f32 %v336, %v344
    %v347 = vmul.f32 %v345, %v345
    %v348 = vmul.f32 %v346, %v346
    %v349 = vsel %vm157, %v347, 0.0
    %350 = vadd.xlane.f32.xlu0 %v349
    %v351 = vpop.xlane.xlu0 %350
    %v352 = vsel %vm157, %v348, 0.0
    %353 = vadd.xlane.f32.xlu0 %v352
    %v354 = vpop.xlane.xlu0 %353
    %v355 = vmul.f32 %v351, %v170
    %v356 = vmul.f32 %v354, %v170
    %v357 = vadd.f32 %v355, 1e-12
    %v358 = vadd.f32 %v356, 1e-12
    %v359 = vrsqrt.pop %v357
    %v360 = vmul.f32 %v359, %v357
    %v361 = vmul.f32 %v360, %v359
    %v362 = vmul.f32 0.5, %v361
    %v363 = vsub.f32 1.5, %v362
    %v364 = vmul.f32 %v359, %v363
    %vm365 = vweird.f32 %v357
    %vm366 = vweird.f32 %v359
    %vm367 = vmor %vm365, %vm366
    %v368 = vsel %vm367, %v359, %v364
    %v369 = vrsqrt.pop %v358
    %v370 = vmul.f32 %v369, %v358
    %v371 = vmul.f32 %v370, %v369
    %v372 = vmul.f32 0.5, %v371
    %v373 = vsub.f32 1.5, %v372
    %v374 = vmul.f32 %v369, %v373
    %vm375 = vweird.f32 %v358
    %vm376 = vweird.f32 %v369
    %vm377 = vmor %vm375, %vm376
    %v378 = vsel %vm377, %v369, %v374
    %v379 = vmul.f32 %v345, %v368
    %v380 = vmul.f32 %v346, %v378
    %v381 = vperm.slane %v24, 0
    %v382 = vmul.f32 %v379, %v381
    %v383 = vmul.f32 %v380, %v381
    %v384 = vperm.slane %v25, 0
    %v385 = vadd.f32 %v382, %v384
    %v386 = vadd.f32 %v383, %v384
    %387 = vst.msk [vmem:[#allocation2] sm:$0xff] %vm157, %v385
    %388 = vst.msk [vmem:[#allocation2 + $0x8] sm:$0xff] %vm157, %v386
    // Predicated region
    $region18: #{tpu_custom_call.1} parent=1 // pred_check
      _
    $region19: #{tpu_custom_call.1} parent=1 // pred_check_branch
      %390 = sbr.rel (0) target = $region21
    $region20: #{tpu_custom_call.1} parent=1 // pred_region
      %392 = vsyncadd [#allocation3], 0
      %s393 = sshll.u32 [#allocation2], 4
      %s394 = int_to_ptr.vmem [resolvable:$true] %s393
      %s395 = sshll.u32 %s4, 4
      %s396 = int_to_ptr.hbm [resolvable:$true] %s395
      %401 = dma.vmem_to_hbm [thread:$0]  %s394, 256, %s396, [#allocation3], 128, 128, 8
    $region21: #{tpu_custom_call.1} parent=1 // pred_fallthru
      _
    // Predicated region
    $region22: #{tpu_custom_call.1} parent=1 // pred_check
      _
    $region23: #{tpu_custom_call.1} parent=1 // pred_check_branch
      %403 = sbr.rel (0) target = $region25
    $region24: #{tpu_custom_call.1} parent=1 // pred_region
      %405 = dma.done [#allocation3], 256
    $region25: #{tpu_custom_call.1} parent=1 // pred_fallthru
      _
    %406 = vsyncpa [#allocation3], 1

</llo_original>
